<compile_context>
chip_gen: v7x
topology: tpu7x:2x2x1
jax: 0.10.0
libtpu: 0.0.40
codegen_flags: <defaults>
</compile_context>

<pallas_src>
import math

import jax
import jax.numpy as jnp
import numpy as np
from jax import lax
from jax.experimental import pallas as pl
from jax.experimental.pallas import tpu as pltpu

EMBEDDING_DIM = 32     # must be even (and >= 4 so half-1 > 0)
PADDING_IDX = 1


def _make_kernel(padding_idx: int, half: int, tile_s: int):
    inv_freq_slope = -math.log(10000.0) / (half - 1)

    def kernel(tok_ref, out_ref, carry_ref, invf_ref, tri_ref):
        # tok_ref:   [tb, ts]      int32
        # out_ref:   [tb, D, ts]   float32   (D = 2*half, S on the lane axis)
        # carry_ref: [tb, 1]       float32   running non-pad count (per S sweep)
        # invf_ref:  [half, 1]     float32   inv_freq, built once per S sweep
        # tri_ref:   [ts, ts]      bfloat16  upper-triangular ones (r <= c)
        si = pl.program_id(1)

        @pl.when(si == 0)
        def _init():
            carry_ref[...] = jnp.zeros_like(carry_ref)
            j = lax.broadcasted_iota(jnp.int32, (half, 1), 0).astype(jnp.float32)
            invf_ref[...] = jnp.exp(j * jnp.float32(inv_freq_slope))
            row = lax.broadcasted_iota(jnp.int32, (tile_s, tile_s), 0)
            col = lax.broadcasted_iota(jnp.int32, (tile_s, tile_s), 1)
            tri_ref[...] = (row <= col).astype(jnp.bfloat16)

        tok = tok_ref[...]                                      # [tb, ts]
        not_pad = tok != padding_idx
        mask_f = not_pad.astype(jnp.float32)                    # [tb, ts]

        # In-tile inclusive prefix sum along S: tiny bf16 MXU matmul
        # (0/1 inputs are exact in bf16; f32 accumulation is exact).
        csum = jnp.dot(not_pad.astype(jnp.bfloat16), tri_ref[...],
                       preferred_element_type=jnp.float32)      # [tb, ts]

        carry = carry_ref[...]                                  # [tb, 1]
        positions = (carry + csum) * mask_f + jnp.float32(padding_idx)
        carry_ref[...] = carry + csum[:, -1:]                   # carry to next S tile

        # Lane-dense transcendentals: [tb, half, ts] with S on the lane axis.
        invf = invf_ref[...]                                    # [half, 1]
        ang = positions[:, None, :] * invf[None, :, :]          # [tb, half, ts]
        gate = mask_f[:, None, :]                               # pad rows -> 0

        # Lane-dense slab stores (sin half / cos half along the D sublane axis).
        out_ref[:, :half, :] = jnp.sin(ang) * gate
        out_ref[:, half:, :] = jnp.cos(ang) * gate

    return kernel


def sinusoidal_positional_embedding(tokens: jax.Array,
                                    embedding_dim: int = EMBEDDING_DIM,
                                    padding_idx: int = PADDING_IDX,
                                    tile_b: int | None = None,
                                    tile_s: int | None = None) -> jax.Array:
    """tokens: [bsz, seq_len] int -> [bsz, seq_len, embedding_dim] float32."""
    tokens = tokens.astype(jnp.int32)
    B, S = tokens.shape
    D = embedding_dim
    if D % 2 != 0:
        # TODO(synk): odd embedding_dim (extra zero column) not handled in-kernel.
        raise NotImplementedError("odd embedding_dim not supported by this kernel")
    half = D // 2
    assert half > 1, "embedding_dim must be >= 4 (half-1 would divide by zero)"

    if tile_s is None:
        tile_s = next((t for t in (512, 256, 128) if S % t == 0), S)
    if tile_b is None:
        tile_b = 8 if B % 8 == 0 else B
    assert S % tile_s == 0 and B % tile_b == 0
    nb, ns = B // tile_b, S // tile_s

    kernel = _make_kernel(padding_idx, half, tile_s)

    out_bds = pl.pallas_call(
        kernel,
        out_shape=jax.ShapeDtypeStruct((B, D, S), jnp.float32),
        grid_spec=pltpu.PrefetchScalarGridSpec(
            num_scalar_prefetch=0,
            grid=(nb, ns),
            in_specs=[pl.BlockSpec((tile_b, tile_s), lambda bi, si: (bi, si))],
            out_specs=pl.BlockSpec((tile_b, D, tile_s), lambda bi, si: (bi, 0, si)),
            scratch_shapes=[
                pltpu.VMEM((tile_b, 1), jnp.float32),        # carried cumsum
                pltpu.VMEM((half, 1), jnp.float32),          # inv_freq
                pltpu.VMEM((tile_s, tile_s), jnp.bfloat16),  # triangular ones
            ],
        ),
        compiler_params=pltpu.CompilerParams(
            dimension_semantics=("parallel", "arbitrary")),
    )(tokens)

    # Layout plumbing: kernel writes lane-dense [B, D, S]; present [B, S, D].
    return jnp.transpose(out_bds, (0, 2, 1))


# ---------- pure-JAX reference (table + gather, mirrors the PyTorch code) ----------
def _get_embedding_table(num_embeddings, embedding_dim, padding_idx):
    half_dim = embedding_dim // 2
    emb = math.log(10000) / (half_dim - 1)
    emb = jnp.exp(jnp.arange(half_dim, dtype=jnp.float32) * -emb)
    emb = jnp.arange(num_embeddings, dtype=jnp.float32)[:, None] * emb[None, :]
    emb = jnp.concatenate([jnp.sin(emb), jnp.cos(emb)], axis=1)
    if padding_idx is not None:
        emb = emb.at[padding_idx, :].set(0.0)
    return emb


def _reference(tokens, embedding_dim=EMBEDDING_DIM, padding_idx=PADDING_IDX):
    bsz, seq_len = tokens.shape
    max_pos = padding_idx + 1 + seq_len
    table = _get_embedding_table(max(1568, max_pos), embedding_dim, padding_idx)
    mask = (tokens != padding_idx).astype(jnp.int32)
    positions = jnp.cumsum(mask, axis=1) * mask + padding_idx
    return table[positions.reshape(-1)].reshape(bsz, seq_len, -1)


if __name__ == "__main__":
    key = jax.random.PRNGKey(0)
    k1, k2 = jax.random.split(key)

    # Test 1: small shape matching the module's typical usage (single tile).
    B, S = 2, 8
    tokens = jax.random.randint(k1, (B, S), minval=0, maxval=20, dtype=jnp.int32)
    tokens = tokens.at[0, 5:].set(PADDING_IDX)   # force some trailing padding
    tokens = tokens.at[1, 6:].set(PADDING_IDX)
    out = jax.block_until_ready(sinusoidal_positional_embedding(tokens))
    np.testing.assert_allclose(np.asarray(out), np.asarray(_reference(tokens)),
                               rtol=1e-5, atol=1e-5)

    # Test 2: multi-tile sequence axis -> exercises the carried cumsum across
    # grid steps and the lane-dense tiled path (positions up to ~250, so allow
    # a few extra ULPs of sin/cos divergence vs the XLA-built table).
    B2, S2 = 2, 256
    tokens2 = jax.random.randint(k2, (B2, S2), minval=0, maxval=20, dtype=jnp.int32)
    tokens2 = tokens2.at[0, 200:].set(PADDING_IDX)
    out2 = jax.block_until_ready(
        sinusoidal_positional_embedding(tokens2, tile_b=2, tile_s=128))
    np.testing.assert_allclose(np.asarray(out2), np.asarray(_reference(tokens2)),
                               rtol=1e-4, atol=5e-4)

    print("KERNEL_OK")
</pallas_src>

<mosaic_0001>
module attributes {stable_mosaic.version = 11 : i64} {
  func.func @kernel(%arg0: i32, %arg1: i32, %arg2: memref<2x8xi32, #tpu.memory_space<vmem>>, %arg3: memref<2x32x8xf32, #tpu.memory_space<vmem>>, %arg4: memref<2x1xf32, #tpu.memory_space<vmem>>, %arg5: memref<16x1xf32, #tpu.memory_space<vmem>>, %arg6: memref<8x8xbf16, #tpu.memory_space<vmem>>) attributes {dimension_semantics = [#tpu.dimension_semantics<parallel>, #tpu.dimension_semantics<arbitrary>], iteration_bounds = array<i64: 1, 1>, scalar_prefetch = 0 : i64, scratch_operands = 3 : i64, tpu.core_type = #tpu.core_type<tc>, window_params = [{transform_indices = @transform_0, window_bounds = array<i64: 2, 8>}, {transform_indices = @transform_1, window_bounds = array<i64: 2, 32, 8>}]} {
    %c0_i32 = arith.constant 0 : i32
    %0 = arith.cmpi eq, %arg1, %c0_i32 : i32
    %1 = arith.extui %0 : i1 to i32
    %c0_i32_0 = arith.constant 0 : i32
    %2 = arith.cmpi ne, %1, %c0_i32_0 : i32
    scf.if %2 {
      %cst_16 = arith.constant 0.000000e+00 : f32
      %37 = vector.broadcast %cst_16 : f32 to vector<2x1xf32>
      %c0_17 = arith.constant 0 : index
      %c0_18 = arith.constant 0 : index
      %38 = vector.load %arg4[%c0_17, %c0_18] : memref<2x1xf32, #tpu.memory_space<vmem>>, vector<2x1xf32>
      tpu.vector_store %arg4[%c0_17, %c0_18], %37 {strides = array<i32>} : memref<2x1xf32, #tpu.memory_space<vmem>>, vector<2x1xf32>,
      %39 = tpu.iota {dimensions = array<i32: 0>} : vector<16x1xi32>
      %40 = arith.sitofp %39 : vector<16x1xi32> to vector<16x1xf32>
      %cst_19 = arith.constant -0.614022672 : f32
      %41 = vector.broadcast %cst_19 : f32 to vector<16x1xf32>
      %42 = arith.mulf %40, %41 : vector<16x1xf32>
      %43 = math.exp %42 : vector<16x1xf32>
      %c0_20 = arith.constant 0 : index
      %c0_21 = arith.constant 0 : index
      %44 = vector.load %arg5[%c0_20, %c0_21] : memref<16x1xf32, #tpu.memory_space<vmem>>, vector<16x1xf32>
      tpu.vector_store %arg5[%c0_20, %c0_21], %43 {strides = array<i32>} : memref<16x1xf32, #tpu.memory_space<vmem>>, vector<16x1xf32>,
      %45 = tpu.iota {dimensions = array<i32: 0>} : vector<8x8xi32>
      %46 = tpu.iota {dimensions = array<i32: 1>} : vector<8x8xi32>
      %47 = arith.cmpi sle, %45, %46 : vector<8x8xi32>
      %48 = arith.extui %47 : vector<8x8xi1> to vector<8x8xi32>
      %49 = arith.sitofp %48 : vector<8x8xi32> to vector<8x8xf32>
      %50 = arith.truncf %49 : vector<8x8xf32> to vector<8x8xbf16>
      %c0_22 = arith.constant 0 : index
      %c0_23 = arith.constant 0 : index
      %51 = vector.load %arg6[%c0_22, %c0_23] : memref<8x8xbf16, #tpu.memory_space<vmem>>, vector<8x8xbf16>
      tpu.vector_store %arg6[%c0_22, %c0_23], %50 {strides = array<i32>} : memref<8x8xbf16, #tpu.memory_space<vmem>>, vector<8x8xbf16>,
    } else {
    }
    %c0 = arith.constant 0 : index
    %c0_1 = arith.constant 0 : index
    %3 = vector.load %arg2[%c0, %c0_1] : memref<2x8xi32, #tpu.memory_space<vmem>>, vector<2x8xi32>
    %c1_i32 = arith.constant 1 : i32
    %4 = vector.broadcast %c1_i32 : i32 to vector<2x8xi32>
    %5 = arith.cmpi ne, %3, %4 : vector<2x8xi32>
    %6 = arith.extui %5 : vector<2x8xi1> to vector<2x8xi32>
    %7 = arith.sitofp %6 : vector<2x8xi32> to vector<2x8xf32>
    %8 = arith.extui %5 : vector<2x8xi1> to vector<2x8xi32>
    %9 = arith.sitofp %8 : vector<2x8xi32> to vector<2x8xf32>
    %10 = arith.truncf %9 : vector<2x8xf32> to vector<2x8xbf16>
    %c0_2 = arith.constant 0 : index
    %c0_3 = arith.constant 0 : index
    %11 = vector.load %arg6[%c0_2, %c0_3] : memref<8x8xbf16, #tpu.memory_space<vmem>>, vector<8x8xbf16>
    %cst = arith.constant dense<0.000000e+00> : vector<2x8xf32>
    %12 = tpu.matmul %10, %11, %cst {dimension_numbers = #tpu.dot_dimension_numbers<[1], [0], [0], [1], [0, 0, 1, 1], [], []>} : vector<2x8xbf16>, vector<8x8xbf16>, vector<2x8xf32> -> vector<2x8xf32>
    %c0_4 = arith.constant 0 : index
    %c0_5 = arith.constant 0 : index
    %13 = vector.load %arg4[%c0_4, %c0_5] : memref<2x1xf32, #tpu.memory_space<vmem>>, vector<2x1xf32>
    %14 = vector.broadcast %13 : vector<2x1xf32> to vector<2x8xf32>
    %15 = arith.addf %14, %12 : vector<2x8xf32>
    %16 = arith.mulf %15, %7 : vector<2x8xf32>
    %cst_6 = arith.constant 1.000000e+00 : f32
    %17 = vector.broadcast %cst_6 : f32 to vector<2x8xf32>
    %18 = arith.addf %16, %17 : vector<2x8xf32>
    %19 = vector.extract_strided_slice %12 {offsets = [0, 7], sizes = [2, 1], strides = [1, 1]} : vector<2x8xf32> to vector<2x1xf32>
    %20 = arith.addf %13, %19 : vector<2x1xf32>
    %c0_7 = arith.constant 0 : index
    %c0_8 = arith.constant 0 : index
    %21 = vector.load %arg4[%c0_7, %c0_8] : memref<2x1xf32, #tpu.memory_space<vmem>>, vector<2x1xf32>
    tpu.vector_store %arg4[%c0_7, %c0_8], %20 {strides = array<i32>} : memref<2x1xf32, #tpu.memory_space<vmem>>, vector<2x1xf32>,
    %c0_9 = arith.constant 0 : index
    %c0_10 = arith.constant 0 : index
    %22 = vector.load %arg5[%c0_9, %c0_10] : memref<16x1xf32, #tpu.memory_space<vmem>>, vector<16x1xf32>
    %23 = vector.shape_cast %18 : vector<2x8xf32> to vector<2x1x8xf32>
    %24 = vector.shape_cast %22 : vector<16x1xf32> to vector<1x16x1xf32>
    %25 = vector.broadcast %23 : vector<2x1x8xf32> to vector<2x16x8xf32>
    %26 = vector.broadcast %24 : vector<1x16x1xf32> to vector<2x16x8xf32>
    %27 = arith.mulf %25, %26 : vector<2x16x8xf32>
    %28 = vector.shape_cast %7 : vector<2x8xf32> to vector<2x1x8xf32>
    %29 = math.sin %27 : vector<2x16x8xf32>
    %30 = vector.broadcast %28 : vector<2x1x8xf32> to vector<2x16x8xf32>
    %31 = arith.mulf %29, %30 : vector<2x16x8xf32>
    %c0_11 = arith.constant 0 : index
    %c0_12 = arith.constant 0 : index
    %c0_13 = arith.constant 0 : index
    %32 = vector.load %arg3[%c0_11, %c0_12, %c0_13] : memref<2x32x8xf32, #tpu.memory_space<vmem>>, vector<2x16x8xf32>
    tpu.vector_store %arg3[%c0_11, %c0_12, %c0_13], %31 {strides = array<i32>} : memref<2x32x8xf32, #tpu.memory_space<vmem>>, vector<2x16x8xf32>,
    %33 = math.cos %27 : vector<2x16x8xf32>
    %34 = vector.broadcast %28 : vector<2x1x8xf32> to vector<2x16x8xf32>
    %35 = arith.mulf %33, %34 : vector<2x16x8xf32>
    %c0_14 = arith.constant 0 : index
    %c16 = arith.constant 16 : index
    %c0_15 = arith.constant 0 : index
    %36 = vector.load %arg3[%c0_14, %c16, %c0_15] : memref<2x32x8xf32, #tpu.memory_space<vmem>>, vector<2x16x8xf32>
    tpu.vector_store %arg3[%c0_14, %c16, %c0_15], %35 {strides = array<i32>} : memref<2x32x8xf32, #tpu.memory_space<vmem>>, vector<2x16x8xf32>,
    return
  }
  func.func @transform_0(%arg0: i32, %arg1: i32) -> (i32, i32) {
    %c0_i32 = arith.constant 0 : i32
    return %arg0, %arg1 : i32, i32
  }
  func.func @transform_1(%arg0: i32, %arg1: i32) -> (i32, i32, i32) {
    %c0_i32 = arith.constant 0 : i32
    %c0_i32_0 = arith.constant 0 : i32
    return %arg0, %c0_i32, %arg1 : i32, i32, i32
  }
}

</mosaic_0001>

<llo_original>
// kernel: tpu_custom_call.1
$region0: #{tpu_custom_call.1}
  #allocation0 [shape = 'u32[]', space=smem, size = 0x4, offset = 0x4, fixed_abs, tag = 'smem constant byte address 0x4 - core index']
  #allocation1 [shape = 'u32[144,128]{1,0:T(1,128)}', space=vmem, size = 0x12000, scoped, tag = 'internal scratch']
  #allocation2 [shape = 'f32[2,1]{1,0:T(2,128)}', space=vmem, size = 0x400, scoped, tag = 'scratch operand']
  #allocation3 [shape = 'f32[16,1]{1,0:T(8,128)}', space=vmem, size = 0x2000, scoped, tag = 'scratch operand']
  #allocation4 [shape = 'bf16[8,8]{1,0:T(8,128)(2,1)}', space=vmem, size = 0x800, scoped, tag = 'scratch operand']
  %s0 = inlined_call_operand.hbm [shape: s32[2,8], index: 0, kind: input, shape index: {}]
  %s1 = inlined_call_operand.vmem [shape: f32[2,32,8], index: 1, kind: output, shape index: {}]
  %s2 = sld [smem:[#allocation0]]
  $region22: #{tpu_custom_call.1} parent=0
    _
  %s4 = ssub.s32 1, %s2
  %s5 = scalar_select 0, %s4, %s2
  $region1: #{tpu_custom_call.1} parent=0
    #allocation5 [shape = 'u8[1024]{0}', space=vmem, size = 0x400, scoped, tag = 'input window, operand 0, single buffered']
    #allocation6 [shape = 's32[1]{0}', space=sflag, size = 0x4, scoped, tag = 'scoped memory for tpu_custom_call.1']
    %6 = vsyncpa [#allocation6], 0
    // Predicated region
    $region2: #{tpu_custom_call.1} parent=1 // pred_check
      _
    $region3: #{tpu_custom_call.1} parent=1 // pred_check_branch
      %8 = sbr.rel (0) target = $region5
    $region4: #{tpu_custom_call.1} parent=1 // pred_region
      %s10 = ssub.s32 32, 32
      %11 = vsyncadd [#allocation6], %s10
      %s13 = sshll.u32 [#allocation5], 4
      %s14 = int_to_ptr.vmem [resolvable:$true] %s13
      %16 = dma.hbm_to_vmem [thread:$0]  %s0, 32, %s14, [#allocation6]
    $region5: #{tpu_custom_call.1} parent=1 // pred_fallthru
      _
    // Predicated region
    $region6: #{tpu_custom_call.1} parent=1 // pred_check
      _
    $region7: #{tpu_custom_call.1} parent=1 // pred_check_branch
      %18 = sbr.rel (0) target = $region9
    $region8: #{tpu_custom_call.1} parent=1 // pred_region
      %19 = dma.done [#allocation6], 32
    $region9: #{tpu_custom_call.1} parent=1 // pred_fallthru
      _
    %p21 = scmp.eq.s32.totalorder 0, 0
    // Predicated region
    $region10: #{tpu_custom_call.1} parent=1 // pred_check
      %p22 = pneg %p21
    $region11: #{tpu_custom_call.1} parent=1 // pred_check_branch
      %24 = sbr.rel (%p22) target = $region13
    $region12: #{tpu_custom_call.1} parent=1 // pred_region
      %vm25 = vcmask 1024
      %26 = vst.msk [vmem:[#allocation2] sm:$0x3] %vm25, 0.0
      %v27 = vlaneseq
      %v28 = vshrl.u32 %v27, 7
      %v29 = vadd.s32 %v28, 8
      %v30 = vcvt.s32.f32 %v28
      %v31 = vcvt.s32.f32 %v29
      %v32 = vmul.f32 %v30, -0.6140227
      %v33 = vmul.f32 %v31, -0.6140227
      %v34 = vmul.f32 %v32, 1.442695
      %v35 = vpow.pop %v34
      %v36 = vmul.f32 %v33, 1.442695
      %v37 = vpow.pop %v36
      %vm38 = vcmask 7168
      %39 = vst.msk [vmem:[#allocation3] sm:$0xff] %vm38, %v35
      %40 = vst.msk [vmem:[#allocation3 + $0x8] sm:$0xff] %vm38, %v37
      %v41 = vlaneseq
      %v42 = vand.u32 %v41, 127
      %vm43 = vcmp.le.s32.totalorder %v28, %v42
      %v44 = vsel %vm43, 1, 0
      %v45 = vcvt.s32.f32 %v44
      %v46 = vpack.c.bf16 %v45, %v45
      %vm47 = vcmask 60416
      %48 = vst.msk [vmem:[#allocation4] sm:$0xf] %vm47, %v46
    $region13: #{tpu_custom_call.1} parent=1 // pred_fallthru
      _
    %v49 = vld [vmem:[#allocation5] sm:$0x3]
    %vm50 = vcmp.ne.s32.totalorder %v49, 1
    %v51 = vsel %vm50, 1, 0
    %v52 = vcvt.s32.f32 %v51
    %v53 = vpack.c.bf16 %v52, %v52
    %v54 = vld [vmem:[#allocation4] sm:$0xf]
    %vm55 = vcmask 64512
    %v57 = vsel %vm55, %v53, 0
    %vm59 = vcmask 1043456
    %v61 = vsel %vm59, %v54, 0
    %63 = vmatprep.subr.bf16.mxu0 0
    %64 = vmatpush1.bf16.msra.mxu0 %v61
    %65 = vmatprep.subr.bf16.mxu0 0
    %66 = vmatpush1.bf16.msra.mxu0 0
    %67 = vmatprep.subr.bf16.mxu0 0
    %68 = vmatpush1.bf16.msra.mxu0 0
    %69 = vmatprep.subr.bf16.mxu0 0
    %70 = vmatpush1.bf16.msra.mxu0 0
    %71 = vmatprep.subr.bf16.mxu0 0
    %72 = vmatpush1.bf16.msra.mxu0 0
    %73 = vmatprep.subr.bf16.mxu0 0
    %74 = vmatpush1.bf16.msra.mxu0 0
    %75 = vmatprep.subr.bf16.mxu0 0
    %76 = vmatpush1.bf16.msra.mxu0 0
    %77 = vmatprep.subr.bf16.mxu0 0
    %78 = vmatpush1.bf16.msra.mxu0 0
    %79 = vmatprep.subr.bf16.mxu0 0
    %80 = vmatpush1.bf16.msra.mxu0 0
    %81 = vmatprep.subr.bf16.mxu0 0
    %82 = vmatpush1.bf16.msra.mxu0 0
    %83 = vmatprep.subr.bf16.mxu0 0
    %84 = vmatpush1.bf16.msra.mxu0 0
    %85 = vmatprep.subr.bf16.mxu0 0
    %86 = vmatpush1.bf16.msra.mxu0 0
    %87 = vmatprep.subr.bf16.mxu0 0
    %88 = vmatpush1.bf16.msra.mxu0 0
    %89 = vmatprep.subr.bf16.mxu0 0
    %90 = vmatpush1.bf16.msra.mxu0 0
    %91 = vmatprep.subr.bf16.mxu0 0
    %92 = vmatpush1.bf16.msra.mxu0 0
    %93 = vmatprep.subr.bf16.mxu0 0
    %94 = vmatpush1.bf16.msra.mxu0 0
    %95 = vmatprep.mubr.bf16.mxu0 0
    %96 = vmatmul.mubr.bf16.gmra.mrb[0].mxu0 %v57
    %v97 = vpop.f32.mrb[0].mxu0
    %v98 = vadd.f32 0.0, %v97
    %v99 = vpop.f32.mrb[0].mxu0
    %v100 = vpop.f32.mrb[0].mxu0
    %v101 = vpop.f32.mrb[0].mxu0
    %102 = vdwg.mxu0
    %v103 = vld [vmem:[#allocation2] sm:$0x3]
    %105 = vset.pattern.permute.xlu0 0
    %106 = vperm.xlu0 %105, %v103
    %v107 = vpop.permute.xlu0 %106
    %v109 = vadd.f32 %v107, %v98
    %v110 = vmul.f32 %v109, %v52
    %v111 = vadd.f32 %v110, 1.0
    %113 = vrot.lane.b32.xlu0 %v98, 121
    %v114 = vpop.permute.xlu0 %113
    %v116 = vadd.f32 %v103, %v114
    %vm117 = vcmask 1024
    %118 = vst.msk [vmem:[#allocation2] sm:$0x3] %vm117, %v116
    %v119 = vld [vmem:[#allocation3] sm:$0xff]
    %v120 = vld [vmem:[#allocation3 + $0x8] sm:$0xff]
    %v123 = vunpack.c.l.s4 1966171168
    %v124 = vunpack.c.0.s8 %v123
    %v125 = vlaneseq
    %v126 = vshrl.u32 %v125, 7
    %v127 = vsub.s32 %v124, %v126
    %v128 = vrot.slane %v111, %v127
    %v129 = vcombine.high %v128, %v128
    %v131 = vunpack.c.l.s4 1966171168
    %v132 = vunpack.c.0.s8 %v131
    %v133 = vlaneseq
    %v134 = vshrl.u32 %v133, 7
    %v135 = vsub.s32 %v132, %v134
    %v136 = vrot.slane %v128, %v135
    %v138 = vunpack.c.l.s4 1966171168
    %v139 = vunpack.c.0.s8 %v138
    %v140 = vlaneseq
    %v141 = vshrl.u32 %v140, 7
    %v142 = vsub.s32 %v139, %v141
    %v143 = vrot.slane %v129, %v142
    %v144 = vlaneseq
    %v145 = vshrl.u32 %v144, 7
    %v146 = vsub.s32 0, %v145
    %v147 = vrot.slane %v136, %v146
    %v148 = vlaneseq
    %v149 = vshrl.u32 %v148, 7
    %v150 = vsub.s32 0, %v149
    %v151 = vrot.slane %v143, %v150
    %155 = vset.pattern.permute.xlu0 0
    %156 = vperm.xlu0 %155, %v119
    %v157 = vpop.permute.xlu0 %156
    %160 = vset.pattern.permute.xlu0 0
    %161 = vperm.xlu0 %160, %v120
    %v162 = vpop.permute.xlu0 %161
    %v164 = vmul.f32 %v147, %v157
    %v165 = vmul.f32 %v147, %v162
    %v166 = vmul.f32 %v151, %v157
    %v167 = vmul.f32 %v151, %v162
    %v170 = vunpack.c.l.s4 1966171168
    %v171 = vunpack.c.0.s8 %v170
    %v172 = vlaneseq
    %v173 = vshrl.u32 %v172, 7
    %v174 = vsub.s32 %v171, %v173
    %v175 = vrot.slane %v52, %v174
    %v176 = vcombine.high %v175, %v175
    %v178 = vunpack.c.l.s4 1966171168
    %v179 = vunpack.c.0.s8 %v178
    %v180 = vlaneseq
    %v181 = vshrl.u32 %v180, 7
    %v182 = vsub.s32 %v179, %v181
    %v183 = vrot.slane %v175, %v182
    %v185 = vunpack.c.l.s4 1966171168
    %v186 = vunpack.c.0.s8 %v185
    %v187 = vlaneseq
    %v188 = vshrl.u32 %v187, 7
    %v189 = vsub.s32 %v186, %v188
    %v190 = vrot.slane %v176, %v189
    %v191 = vand.u32 2147483647, %v164
    %vm192 = vcmp.le.f32.partialorder %v191, 0.7853982
    %vm193 = vcmp.lt.s32.totalorder %v164, 0
    %v194 = vand.u32 %v164, 2139095040
    %v195 = vshrl.u32 %v194, 23
    %v196 = vsub.s32 %v195, 127
    %v197 = vand.u32 2147483647, %v164
    %v198 = vand.u32 %v197, 8388607
    %v199 = vor.u32 %v198, 8388608
    %v200 = vsub.s32 0, %v199
    %v201 = vadd.s32 %v196, 1
    %vm202 = vcmp.gt.s32.totalorder %v201, 0
    %v203 = vsel %vm202, %v201, 0
    %v204 = vshrl.u32 %v203, 5
    %v205 = vand.u32 %v203, 31
    %v206 = vsub.s32 32, %v205
    %v207 = vshrl.u32 683565275, %v206
    %v208 = vshll.u32 683565275, %v205
    %v209 = vshrl.u32 2475754826, %v206
    %v210 = vor.u32 %v208, %v209
    %v211 = vshll.u32 2475754826, %v205
    %v212 = vshrl.u32 2131351028, %v206
    %v213 = vor.u32 %v211, %v212
    %v214 = vshll.u32 2131351028, %v205
    %v215 = vshrl.u32 2102212464, %v206
    %v216 = vor.u32 %v214, %v215
    %v217 = vshll.u32 2102212464, %v205
    %v218 = vshrl.u32 920167782, %v206
    %v219 = vor.u32 %v217, %v218
    %v220 = vshll.u32 920167782, %v205
    %v221 = vshrl.u32 1326507024, %v206
    %v222 = vor.u32 %v220, %v221
    %vm223 = vcmp.lt.s32.totalorder %v204, 1
    %vm224 = vcmp.lt.s32.totalorder %v204, 2
    %vm225 = vcmp.lt.s32.totalorder %v204, 3
    %vm226 = vcmp.lt.s32.totalorder %v204, 4
    %v227 = vsel %vm223, %v207, %v210
    %v228 = vsel %vm226, %v216, 2102212464
    %v229 = vsel %vm225, %v213, %v228
    %v230 = vsel %vm224, %v227, %v229
    %v231 = vsel %vm223, %v210, %v213
    %v232 = vsel %vm226, %v219, 920167782
    %v233 = vsel %vm225, %v216, %v232
    %v234 = vsel %vm224, %v231, %v233
    %v235 = vsel %vm223, %v213, %v216
    %v236 = vsel %vm226, %v222, 1326507024
    %v237 = vsel %vm225, %v219, %v236
    %v238 = vsel %vm224, %v235, %v237
    %v239 = vshll.u32 %v199, 8
    %v240 = vmul.u32.u64.compose %v239, %v238
    %v241 = vextract.low.u32 %v240
    %v242 = vextract.high.u32 %v240
    %v243 = vmul.u32.u64.compose %v239, %v234
    %v244 = vextract.low.u32 %v243
    %v245 = vextract.high.u32 %v243
    %v246 = vmul.u32 %v239, %v230
    %v247 = vadd.s32 %v242, %v244
    %vm248 = vc.u32 %v242, %v244
    %v249 = vadd.s32 %v245, 1
    %v250 = vsel %vm248, %v249, %v245
    %v251 = vadd.s32 %v246, %v250
    %v252 = vadd.s32 %v251, 536870912
    %v253 = vshrl.u32 %v252, 30
    %v254 = vshll.u32 %v253, 30
    %v255 = vsub.s32 %v251, %v254
    %vm256 = vcmp.lt.s32.totalorder %v255, 0
    %v257 = vsub.s32 0, %v255
    %v258 = vsel %vm256, %v257, %v255
    %v259 = vclz %v258
    %v260 = vsub.s32 %v259, 2
    %vm261 = vcmp.gt.s32.totalorder 0, %v260
    %v262 = vsel %vm261, 0, %v260
    %v263 = vsub.s32 32, %v262
    %v264 = vshll.u32 %v255, %v262
    %v265 = vshrl.u32 %v247, %v263
    %v266 = vor.u32 %v264, %v265
    %v267 = vsub.s32 4294967266, %v262
    %v268 = vadd.s32 %v267, 127
    %v269 = vshll.u32 %v268, 23
    %v270 = vor.u32 4788187, %v269
    %v271 = vand.u32 2147483647, %v270
    %v273 = vcvt.s32.f32 %v266
    %v274 = vmul.f32 %v273, %v271
    %v275 = vxor.u32 %v274, 2147483648
    %v276 = vsel %vm193, %v275, %v274
    %v277 = vsub.s32 4, %v253
    %v278 = vsel %vm193, %v277, %v253
    %v279 = vsel %vm192, %v164, %v276
    %v280 = vsel %vm192, 0, %v278
    %v281 = vcosq.f32.pop %v279
    %v282 = vsinq.f32.pop %v279
    %vm283 = vweird.f32 %v164
    %v284 = vadd.s32 %v280, 3
    %v285 = vand.u32 %v284, 3
    %vm286 = vcmp.lt.s32.totalorder %v285, 2
    %vm287 = vcmp.eq.s32.totalorder %v285, 0
    %v288 = vxor.u32 %v282, 2147483648
    %v289 = vsel %vm287, %v281, %v288
    %vm290 = vcmp.eq.s32.totalorder %v285, 2
    %v291 = vxor.u32 %v281, 2147483648
    %v292 = vsel %vm290, %v291, %v282
    %v293 = vsel %vm286, %v289, %v292
    %v294 = vsel %vm283, nan, %v293
    %v295 = vand.u32 2147483647, %v165
    %vm296 = vcmp.le.f32.partialorder %v295, 0.7853982
    %vm297 = vcmp.lt.s32.totalorder %v165, 0
    %v298 = vand.u32 %v165, 2139095040
    %v299 = vshrl.u32 %v298, 23
    %v300 = vsub.s32 %v299, 127
    %v301 = vand.u32 2147483647, %v165
    %v302 = vand.u32 %v301, 8388607
    %v303 = vor.u32 %v302, 8388608
    %v304 = vsub.s32 0, %v303
    %v305 = vadd.s32 %v300, 1
    %vm306 = vcmp.gt.s32.totalorder %v305, 0
    %v307 = vsel %vm306, %v305, 0
    %v308 = vshrl.u32 %v307, 5
    %v309 = vand.u32 %v307, 31
    %v310 = vsub.s32 32, %v309
    %v311 = vshrl.u32 683565275, %v310
    %v312 = vshll.u32 683565275, %v309
    %v313 = vshrl.u32 2475754826, %v310
    %v314 = vor.u32 %v312, %v313
    %v315 = vshll.u32 2475754826, %v309
    %v316 = vshrl.u32 2131351028, %v310
    %v317 = vor.u32 %v315, %v316
    %v318 = vshll.u32 2131351028, %v309
    %v319 = vshrl.u32 2102212464, %v310
    %v320 = vor.u32 %v318, %v319
    %v321 = vshll.u32 2102212464, %v309
    %v322 = vshrl.u32 920167782, %v310
    %v323 = vor.u32 %v321, %v322
    %v324 = vshll.u32 920167782, %v309
    %v325 = vshrl.u32 1326507024, %v310
    %v326 = vor.u32 %v324, %v325
    %vm327 = vcmp.lt.s32.totalorder %v308, 1
    %vm328 = vcmp.lt.s32.totalorder %v308, 2
    %vm329 = vcmp.lt.s32.totalorder %v308, 3
    %vm330 = vcmp.lt.s32.totalorder %v308, 4
    %v331 = vsel %vm327, %v311, %v314
    %v332 = vsel %vm330, %v320, 2102212464
    %v333 = vsel %vm329, %v317, %v332
    %v334 = vsel %vm328, %v331, %v333
    %v335 = vsel %vm327, %v314, %v317
    %v336 = vsel %vm330, %v323, 920167782
    %v337 = vsel %vm329, %v320, %v336
    %v338 = vsel %vm328, %v335, %v337
    %v339 = vsel %vm327, %v317, %v320
    %v340 = vsel %vm330, %v326, 1326507024
    %v341 = vsel %vm329, %v323, %v340
    %v342 = vsel %vm328, %v339, %v341
    %v343 = vshll.u32 %v303, 8
    %v344 = vmul.u32.u64.compose %v343, %v342
    %v345 = vextract.low.u32 %v344
    %v346 = vextract.high.u32 %v344
    %v347 = vmul.u32.u64.compose %v343, %v338
    %v348 = vextract.low.u32 %v347
    %v349 = vextract.high.u32 %v347
    %v350 = vmul.u32 %v343, %v334
    %v351 = vadd.s32 %v346, %v348
    %vm352 = vc.u32 %v346, %v348
    %v353 = vadd.s32 %v349, 1
    %v354 = vsel %vm352, %v353, %v349
    %v355 = vadd.s32 %v350, %v354
    %v356 = vadd.s32 %v355, 536870912
    %v357 = vshrl.u32 %v356, 30
    %v358 = vshll.u32 %v357, 30
    %v359 = vsub.s32 %v355, %v358
    %vm360 = vcmp.lt.s32.totalorder %v359, 0
    %v361 = vsub.s32 0, %v359
    %v362 = vsel %vm360, %v361, %v359
    %v363 = vclz %v362
    %v364 = vsub.s32 %v363, 2
    %vm365 = vcmp.gt.s32.totalorder 0, %v364
    %v366 = vsel %vm365, 0, %v364
    %v367 = vsub.s32 32, %v366
    %v368 = vshll.u32 %v359, %v366
    %v369 = vshrl.u32 %v351, %v367
    %v370 = vor.u32 %v368, %v369
    %v371 = vsub.s32 4294967266, %v366
    %v372 = vadd.s32 %v371, 127
    %v373 = vshll.u32 %v372, 23
    %v374 = vor.u32 4788187, %v373
    %v375 = vand.u32 2147483647, %v374
    %v377 = vcvt.s32.f32 %v370
    %v378 = vmul.f32 %v377, %v375
    %v379 = vxor.u32 %v378, 2147483648
    %v380 = vsel %vm297, %v379, %v378
    %v381 = vsub.s32 4, %v357
    %v382 = vsel %vm297, %v381, %v357
    %v383 = vsel %vm296, %v165, %v380
    %v384 = vsel %vm296, 0, %v382
    %v385 = vcosq.f32.pop %v383
    %v386 = vsinq.f32.pop %v383
    %vm387 = vweird.f32 %v165
    %v388 = vadd.s32 %v384, 3
    %v389 = vand.u32 %v388, 3
    %vm390 = vcmp.lt.s32.totalorder %v389, 2
    %vm391 = vcmp.eq.s32.totalorder %v389, 0
    %v392 = vxor.u32 %v386, 2147483648
    %v393 = vsel %vm391, %v385, %v392
    %vm394 = vcmp.eq.s32.totalorder %v389, 2
    %v395 = vxor.u32 %v385, 2147483648
    %v396 = vsel %vm394, %v395, %v386
    %v397 = vsel %vm390, %v393, %v396
    %v398 = vsel %vm387, nan, %v397
    %v399 = vand.u32 2147483647, %v166
    %vm400 = vcmp.le.f32.partialorder %v399, 0.7853982
    %vm401 = vcmp.lt.s32.totalorder %v166, 0
    %v402 = vand.u32 %v166, 2139095040
    %v403 = vshrl.u32 %v402, 23
    %v404 = vsub.s32 %v403, 127
    %v405 = vand.u32 2147483647, %v166
    %v406 = vand.u32 %v405, 8388607
    %v407 = vor.u32 %v406, 8388608
    %v408 = vsub.s32 0, %v407
    %v409 = vadd.s32 %v404, 1
    %vm410 = vcmp.gt.s32.totalorder %v409, 0
    %v411 = vsel %vm410, %v409, 0
    %v412 = vshrl.u32 %v411, 5
    %v413 = vand.u32 %v411, 31
    %v414 = vsub.s32 32, %v413
    %v415 = vshrl.u32 683565275, %v414
    %v416 = vshll.u32 683565275, %v413
    %v417 = vshrl.u32 2475754826, %v414
    %v418 = vor.u32 %v416, %v417
    %v419 = vshll.u32 2475754826, %v413
    %v420 = vshrl.u32 2131351028, %v414
    %v421 = vor.u32 %v419, %v420
    %v422 = vshll.u32 2131351028, %v413
    %v423 = vshrl.u32 2102212464, %v414
    %v424 = vor.u32 %v422, %v423
    %v425 = vshll.u32 2102212464, %v413
    %v426 = vshrl.u32 920167782, %v414
    %v427 = vor.u32 %v425, %v426
    %v428 = vshll.u32 920167782, %v413
    %v429 = vshrl.u32 1326507024, %v414
    %v430 = vor.u32 %v428, %v429
    %vm431 = vcmp.lt.s32.totalorder %v412, 1
    %vm432 = vcmp.lt.s32.totalorder %v412, 2
    %vm433 = vcmp.lt.s32.totalorder %v412, 3
    %vm434 = vcmp.lt.s32.totalorder %v412, 4
    %v435 = vsel %vm431, %v415, %v418
    %v436 = vsel %vm434, %v424, 2102212464
    %v437 = vsel %vm433, %v421, %v436
    %v438 = vsel %vm432, %v435, %v437
    %v439 = vsel %vm431, %v418, %v421
    %v440 = vsel %vm434, %v427, 920167782
    %v441 = vsel %vm433, %v424, %v440
    %v442 = vsel %vm432, %v439, %v441
    %v443 = vsel %vm431, %v421, %v424
    %v444 = vsel %vm434, %v430, 1326507024
    %v445 = vsel %vm433, %v427, %v444
    %v446 = vsel %vm432, %v443, %v445
    %v447 = vshll.u32 %v407, 8
    %v448 = vmul.u32.u64.compose %v447, %v446
    %v449 = vextract.low.u32 %v448
    %v450 = vextract.high.u32 %v448
    %v451 = vmul.u32.u64.compose %v447, %v442
    %v452 = vextract.low.u32 %v451
    %v453 = vextract.high.u32 %v451
    %v454 = vmul.u32 %v447, %v438
    %v455 = vadd.s32 %v450, %v452
    %vm456 = vc.u32 %v450, %v452
    %v457 = vadd.s32 %v453, 1
    %v458 = vsel %vm456, %v457, %v453
    %v459 = vadd.s32 %v454, %v458
    %v460 = vadd.s32 %v459, 536870912
    %v461 = vshrl.u32 %v460, 30
    %v462 = vshll.u32 %v461, 30
    %v463 = vsub.s32 %v459, %v462
    %vm464 = vcmp.lt.s32.totalorder %v463, 0
    %v465 = vsub.s32 0, %v463
    %v466 = vsel %vm464, %v465, %v463
    %v467 = vclz %v466
    %v468 = vsub.s32 %v467, 2
    %vm469 = vcmp.gt.s32.totalorder 0, %v468
    %v470 = vsel %vm469, 0, %v468
    %v471 = vsub.s32 32, %v470
    %v472 = vshll.u32 %v463, %v470
    %v473 = vshrl.u32 %v455, %v471
    %v474 = vor.u32 %v472, %v473
    %v475 = vsub.s32 4294967266, %v470
    %v476 = vadd.s32 %v475, 127
    %v477 = vshll.u32 %v476, 23
    %v478 = vor.u32 4788187, %v477
    %v479 = vand.u32 2147483647, %v478
    %v481 = vcvt.s32.f32 %v474
    %v482 = vmul.f32 %v481, %v479
    %v483 = vxor.u32 %v482, 2147483648
    %v484 = vsel %vm401, %v483, %v482
    %v485 = vsub.s32 4, %v461
    %v486 = vsel %vm401, %v485, %v461
    %v487 = vsel %vm400, %v166, %v484
    %v488 = vsel %vm400, 0, %v486
    %v489 = vcosq.f32.pop %v487
    %v490 = vsinq.f32.pop %v487
    %vm491 = vweird.f32 %v166
    %v492 = vadd.s32 %v488, 3
    %v493 = vand.u32 %v492, 3
    %vm494 = vcmp.lt.s32.totalorder %v493, 2
    %vm495 = vcmp.eq.s32.totalorder %v493, 0
    %v496 = vxor.u32 %v490, 2147483648
    %v497 = vsel %vm495, %v489, %v496
    %vm498 = vcmp.eq.s32.totalorder %v493, 2
    %v499 = vxor.u32 %v489, 2147483648
    %v500 = vsel %vm498, %v499, %v490
    %v501 = vsel %vm494, %v497, %v500
    %v502 = vsel %vm491, nan, %v501
    %v503 = vand.u32 2147483647, %v167
    %vm504 = vcmp.le.f32.partialorder %v503, 0.7853982
    %vm505 = vcmp.lt.s32.totalorder %v167, 0
    %v506 = vand.u32 %v167, 2139095040
    %v507 = vshrl.u32 %v506, 23
    %v508 = vsub.s32 %v507, 127
    %v509 = vand.u32 2147483647, %v167
    %v510 = vand.u32 %v509, 8388607
    %v511 = vor.u32 %v510, 8388608
    %v512 = vsub.s32 0, %v511
    %v513 = vadd.s32 %v508, 1
    %vm514 = vcmp.gt.s32.totalorder %v513, 0
    %v515 = vsel %vm514, %v513, 0
    %v516 = vshrl.u32 %v515, 5
    %v517 = vand.u32 %v515, 31
    %v518 = vsub.s32 32, %v517
    %v519 = vshrl.u32 683565275, %v518
    %v520 = vshll.u32 683565275, %v517
    %v521 = vshrl.u32 2475754826, %v518
    %v522 = vor.u32 %v520, %v521
    %v523 = vshll.u32 2475754826, %v517
    %v524 = vshrl.u32 2131351028, %v518
    %v525 = vor.u32 %v523, %v524
    %v526 = vshll.u32 2131351028, %v517
    %v527 = vshrl.u32 2102212464, %v518
    %v528 = vor.u32 %v526, %v527
    %v529 = vshll.u32 2102212464, %v517
    %v530 = vshrl.u32 920167782, %v518
    %v531 = vor.u32 %v529, %v530
    %v532 = vshll.u32 920167782, %v517
    %v533 = vshrl.u32 1326507024, %v518
    %v534 = vor.u32 %v532, %v533
    %vm535 = vcmp.lt.s32.totalorder %v516, 1
    %vm536 = vcmp.lt.s32.totalorder %v516, 2
    %vm537 = vcmp.lt.s32.totalorder %v516, 3
    %vm538 = vcmp.lt.s32.totalorder %v516, 4
    %v539 = vsel %vm535, %v519, %v522
    %v540 = vsel %vm538, %v528, 2102212464
    %v541 = vsel %vm537, %v525, %v540
    %v542 = vsel %vm536, %v539, %v541
    %v543 = vsel %vm535, %v522, %v525
    %v544 = vsel %vm538, %v531, 920167782
    %v545 = vsel %vm537, %v528, %v544
    %v546 = vsel %vm536, %v543, %v545
    %v547 = vsel %vm535, %v525, %v528
    %v548 = vsel %vm538, %v534, 1326507024
    %v549 = vsel %vm537, %v531, %v548
    %v550 = vsel %vm536, %v547, %v549
    %v551 = vshll.u32 %v511, 8
    %v552 = vmul.u32.u64.compose %v551, %v550
    %v553 = vextract.low.u32 %v552
    %v554 = vextract.high.u32 %v552
    %v555 = vmul.u32.u64.compose %v551, %v546
    %v556 = vextract.low.u32 %v555
    %v557 = vextract.high.u32 %v555
    %v558 = vmul.u32 %v551, %v542
    %v559 = vadd.s32 %v554, %v556
    %vm560 = vc.u32 %v554, %v556
    %v561 = vadd.s32 %v557, 1
    %v562 = vsel %vm560, %v561, %v557
    %v563 = vadd.s32 %v558, %v562
    %v564 = vadd.s32 %v563, 536870912
    %v565 = vshrl.u32 %v564, 30
    %v566 = vshll.u32 %v565, 30
    %v567 = vsub.s32 %v563, %v566
    %vm568 = vcmp.lt.s32.totalorder %v567, 0
    %v569 = vsub.s32 0, %v567
    %v570 = vsel %vm568, %v569, %v567
    %v571 = vclz %v570
    %v572 = vsub.s32 %v571, 2
    %vm573 = vcmp.gt.s32.totalorder 0, %v572
    %v574 = vsel %vm573, 0, %v572
    %v575 = vsub.s32 32, %v574
    %v576 = vshll.u32 %v567, %v574
    %v577 = vshrl.u32 %v559, %v575
    %v578 = vor.u32 %v576, %v577
    %v579 = vsub.s32 4294967266, %v574
    %v580 = vadd.s32 %v579, 127
    %v581 = vshll.u32 %v580, 23
    %v582 = vor.u32 4788187, %v581
    %v583 = vand.u32 2147483647, %v582
    %v585 = vcvt.s32.f32 %v578
    %v586 = vmul.f32 %v585, %v583
    %v587 = vxor.u32 %v586, 2147483648
    %v588 = vsel %vm505, %v587, %v586
    %v589 = vsub.s32 4, %v565
    %v590 = vsel %vm505, %v589, %v565
    %v591 = vsel %vm504, %v167, %v588
    %v592 = vsel %vm504, 0, %v590
    %v593 = vcosq.f32.pop %v591
    %v594 = vsinq.f32.pop %v591
    %vm595 = vweird.f32 %v167
    %v596 = vadd.s32 %v592, 3
    %v597 = vand.u32 %v596, 3
    %vm598 = vcmp.lt.s32.totalorder %v597, 2
    %vm599 = vcmp.eq.s32.totalorder %v597, 0
    %v600 = vxor.u32 %v594, 2147483648
    %v601 = vsel %vm599, %v593, %v600
    %vm602 = vcmp.eq.s32.totalorder %v597, 2
    %v603 = vxor.u32 %v593, 2147483648
    %v604 = vsel %vm602, %v603, %v594
    %v605 = vsel %vm598, %v601, %v604
    %v606 = vsel %vm595, nan, %v605
    %v607 = vlaneseq
    %v608 = vshrl.u32 %v607, 7
    %v609 = vsub.s32 0, %v608
    %v610 = vrot.slane %v183, %v609
    %v611 = vlaneseq
    %v612 = vshrl.u32 %v611, 7
    %v613 = vsub.s32 0, %v612
    %v614 = vrot.slane %v190, %v613
    %v617 = vmul.f32 %v294, %v610
    %v618 = vmul.f32 %v398, %v610
    %v619 = vmul.f32 %v502, %v614
    %v620 = vmul.f32 %v606, %v614
    %621 = vst.msk [vmem:[%s1] sm:$0xff] %vm55, %v617
    %622 = vst.msk [vmem:[%s1 + $0x8] sm:$0xff] %vm55, %v618
    %623 = vst.msk [vmem:[%s1 + $0x20] sm:$0xff] %vm55, %v619
    %624 = vst.msk [vmem:[%s1 + $0x28] sm:$0xff] %vm55, %v620
    %v625 = vand.u32 2147483647, %v164
    %vm626 = vcmp.le.f32.partialorder %v625, 0.7853982
    %vm627 = vcmp.lt.s32.totalorder %v164, 0
    %v628 = vand.u32 %v164, 2139095040
    %v629 = vshrl.u32 %v628, 23
    %v630 = vsub.s32 %v629, 127
    %v631 = vand.u32 2147483647, %v164
    %v632 = vand.u32 %v631, 8388607
    %v633 = vor.u32 %v632, 8388608
    %v634 = vsub.s32 0, %v633
    %v635 = vadd.s32 %v630, 1
    %vm636 = vcmp.gt.s32.totalorder %v635, 0
    %v637 = vsel %vm636, %v635, 0
    %v638 = vshrl.u32 %v637, 5
    %v639 = vand.u32 %v637, 31
    %v640 = vsub.s32 32, %v639
    %v641 = vshrl.u32 683565275, %v640
    %v642 = vshll.u32 683565275, %v639
    %v643 = vshrl.u32 2475754826, %v640
    %v644 = vor.u32 %v642, %v643
    %v645 = vshll.u32 2475754826, %v639
    %v646 = vshrl.u32 2131351028, %v640
    %v647 = vor.u32 %v645, %v646
    %v648 = vshll.u32 2131351028, %v639
    %v649 = vshrl.u32 2102212464, %v640
    %v650 = vor.u32 %v648, %v649
    %v651 = vshll.u32 2102212464, %v639
    %v652 = vshrl.u32 920167782, %v640
    %v653 = vor.u32 %v651, %v652
    %v654 = vshll.u32 920167782, %v639
    %v655 = vshrl.u32 1326507024, %v640
    %v656 = vor.u32 %v654, %v655
    %vm657 = vcmp.lt.s32.totalorder %v638, 1
    %vm658 = vcmp.lt.s32.totalorder %v638, 2
    %vm659 = vcmp.lt.s32.totalorder %v638, 3
    %vm660 = vcmp.lt.s32.totalorder %v638, 4
    %v661 = vsel %vm657, %v641, %v644
    %v662 = vsel %vm660, %v650, 2102212464
    %v663 = vsel %vm659, %v647, %v662
    %v664 = vsel %vm658, %v661, %v663
    %v665 = vsel %vm657, %v644, %v647
    %v666 = vsel %vm660, %v653, 920167782
    %v667 = vsel %vm659, %v650, %v666
    %v668 = vsel %vm658, %v665, %v667
    %v669 = vsel %vm657, %v647, %v650
    %v670 = vsel %vm660, %v656, 1326507024
    %v671 = vsel %vm659, %v653, %v670
    %v672 = vsel %vm658, %v669, %v671
    %v673 = vshll.u32 %v633, 8
    %v674 = vmul.u32.u64.compose %v673, %v672
    %v675 = vextract.low.u32 %v674
    %v676 = vextract.high.u32 %v674
    %v677 = vmul.u32.u64.compose %v673, %v668
    %v678 = vextract.low.u32 %v677
    %v679 = vextract.high.u32 %v677
    %v680 = vmul.u32 %v673, %v664
    %v681 = vadd.s32 %v676, %v678
    %vm682 = vc.u32 %v676, %v678
    %v683 = vadd.s32 %v679, 1
    %v684 = vsel %vm682, %v683, %v679
    %v685 = vadd.s32 %v680, %v684
    %v686 = vadd.s32 %v685, 536870912
    %v687 = vshrl.u32 %v686, 30
    %v688 = vshll.u32 %v687, 30
    %v689 = vsub.s32 %v685, %v688
    %vm690 = vcmp.lt.s32.totalorder %v689, 0
    %v691 = vsub.s32 0, %v689
    %v692 = vsel %vm690, %v691, %v689
    %v693 = vclz %v692
    %v694 = vsub.s32 %v693, 2
    %vm695 = vcmp.gt.s32.totalorder 0, %v694
    %v696 = vsel %vm695, 0, %v694
    %v697 = vsub.s32 32, %v696
    %v698 = vshll.u32 %v689, %v696
    %v699 = vshrl.u32 %v681, %v697
    %v700 = vor.u32 %v698, %v699
    %v701 = vsub.s32 4294967266, %v696
    %v702 = vadd.s32 %v701, 127
    %v703 = vshll.u32 %v702, 23
    %v704 = vor.u32 4788187, %v703
    %v705 = vand.u32 2147483647, %v704
    %v707 = vcvt.s32.f32 %v700
    %v708 = vmul.f32 %v707, %v705
    %v709 = vxor.u32 %v708, 2147483648
    %v710 = vsel %vm627, %v709, %v708
    %v711 = vsub.s32 4, %v687
    %v712 = vsel %vm627, %v711, %v687
    %v713 = vsel %vm626, %v164, %v710
    %v714 = vsel %vm626, 0, %v712
    %v715 = vcosq.f32.pop %v713
    %v716 = vsinq.f32.pop %v713
    %vm717 = vweird.f32 %v164
    %v718 = vand.u32 %v714, 3
    %vm719 = vcmp.lt.s32.totalorder %v718, 2
    %vm720 = vcmp.eq.s32.totalorder %v718, 0
    %v721 = vxor.u32 %v716, 2147483648
    %v722 = vsel %vm720, %v715, %v721
    %vm723 = vcmp.eq.s32.totalorder %v718, 2
    %v724 = vxor.u32 %v715, 2147483648
    %v725 = vsel %vm723, %v724, %v716
    %v726 = vsel %vm719, %v722, %v725
    %v727 = vsel %vm717, nan, %v726
    %v728 = vand.u32 2147483647, %v165
    %vm729 = vcmp.le.f32.partialorder %v728, 0.7853982
    %vm730 = vcmp.lt.s32.totalorder %v165, 0
    %v731 = vand.u32 %v165, 2139095040
    %v732 = vshrl.u32 %v731, 23
    %v733 = vsub.s32 %v732, 127
    %v734 = vand.u32 2147483647, %v165
    %v735 = vand.u32 %v734, 8388607
    %v736 = vor.u32 %v735, 8388608
    %v737 = vsub.s32 0, %v736
    %v738 = vadd.s32 %v733, 1
    %vm739 = vcmp.gt.s32.totalorder %v738, 0
    %v740 = vsel %vm739, %v738, 0
    %v741 = vshrl.u32 %v740, 5
    %v742 = vand.u32 %v740, 31
    %v743 = vsub.s32 32, %v742
    %v744 = vshrl.u32 683565275, %v743
    %v745 = vshll.u32 683565275, %v742
    %v746 = vshrl.u32 2475754826, %v743
    %v747 = vor.u32 %v745, %v746
    %v748 = vshll.u32 2475754826, %v742
    %v749 = vshrl.u32 2131351028, %v743
    %v750 = vor.u32 %v748, %v749
    %v751 = vshll.u32 2131351028, %v742
    %v752 = vshrl.u32 2102212464, %v743
    %v753 = vor.u32 %v751, %v752
    %v754 = vshll.u32 2102212464, %v742
    %v755 = vshrl.u32 920167782, %v743
    %v756 = vor.u32 %v754, %v755
    %v757 = vshll.u32 920167782, %v742
    %v758 = vshrl.u32 1326507024, %v743
    %v759 = vor.u32 %v757, %v758
    %vm760 = vcmp.lt.s32.totalorder %v741, 1
    %vm761 = vcmp.lt.s32.totalorder %v741, 2
    %vm762 = vcmp.lt.s32.totalorder %v741, 3
    %vm763 = vcmp.lt.s32.totalorder %v741, 4
    %v764 = vsel %vm760, %v744, %v747
    %v765 = vsel %vm763, %v753, 2102212464
    %v766 = vsel %vm762, %v750, %v765
    %v767 = vsel %vm761, %v764, %v766
    %v768 = vsel %vm760, %v747, %v750
    %v769 = vsel %vm763, %v756, 920167782
    %v770 = vsel %vm762, %v753, %v769
    %v771 = vsel %vm761, %v768, %v770
    %v772 = vsel %vm760, %v750, %v753
    %v773 = vsel %vm763, %v759, 1326507024
    %v774 = vsel %vm762, %v756, %v773
    %v775 = vsel %vm761, %v772, %v774
    %v776 = vshll.u32 %v736, 8
    %v777 = vmul.u32.u64.compose %v776, %v775
    %v778 = vextract.low.u32 %v777
    %v779 = vextract.high.u32 %v777
    %v780 = vmul.u32.u64.compose %v776, %v771
    %v781 = vextract.low.u32 %v780
    %v782 = vextract.high.u32 %v780
    %v783 = vmul.u32 %v776, %v767
    %v784 = vadd.s32 %v779, %v781
    %vm785 = vc.u32 %v779, %v781
    %v786 = vadd.s32 %v782, 1
    %v787 = vsel %vm785, %v786, %v782
    %v788 = vadd.s32 %v783, %v787
    %v789 = vadd.s32 %v788, 536870912
    %v790 = vshrl.u32 %v789, 30
    %v791 = vshll.u32 %v790, 30
    %v792 = vsub.s32 %v788, %v791
    %vm793 = vcmp.lt.s32.totalorder %v792, 0
    %v794 = vsub.s32 0, %v792
    %v795 = vsel %vm793, %v794, %v792
    %v796 = vclz %v795
    %v797 = vsub.s32 %v796, 2
    %vm798 = vcmp.gt.s32.totalorder 0, %v797
    %v799 = vsel %vm798, 0, %v797
    %v800 = vsub.s32 32, %v799
    %v801 = vshll.u32 %v792, %v799
    %v802 = vshrl.u32 %v784, %v800
    %v803 = vor.u32 %v801, %v802
    %v804 = vsub.s32 4294967266, %v799
    %v805 = vadd.s32 %v804, 127
    %v806 = vshll.u32 %v805, 23
    %v807 = vor.u32 4788187, %v806
    %v808 = vand.u32 2147483647, %v807
    %v810 = vcvt.s32.f32 %v803
    %v811 = vmul.f32 %v810, %v808
    %v812 = vxor.u32 %v811, 2147483648
    %v813 = vsel %vm730, %v812, %v811
    %v814 = vsub.s32 4, %v790
    %v815 = vsel %vm730, %v814, %v790
    %v816 = vsel %vm729, %v165, %v813
    %v817 = vsel %vm729, 0, %v815
    %v818 = vcosq.f32.pop %v816
    %v819 = vsinq.f32.pop %v816
    %vm820 = vweird.f32 %v165
    %v821 = vand.u32 %v817, 3
    %vm822 = vcmp.lt.s32.totalorder %v821, 2
    %vm823 = vcmp.eq.s32.totalorder %v821, 0
    %v824 = vxor.u32 %v819, 2147483648
    %v825 = vsel %vm823, %v818, %v824
    %vm826 = vcmp.eq.s32.totalorder %v821, 2
    %v827 = vxor.u32 %v818, 2147483648
    %v828 = vsel %vm826, %v827, %v819
    %v829 = vsel %vm822, %v825, %v828
    %v830 = vsel %vm820, nan, %v829
    %v831 = vand.u32 2147483647, %v166
    %vm832 = vcmp.le.f32.partialorder %v831, 0.7853982
    %vm833 = vcmp.lt.s32.totalorder %v166, 0
    %v834 = vand.u32 %v166, 2139095040
    %v835 = vshrl.u32 %v834, 23
    %v836 = vsub.s32 %v835, 127
    %v837 = vand.u32 2147483647, %v166
    %v838 = vand.u32 %v837, 8388607
    %v839 = vor.u32 %v838, 8388608
    %v840 = vsub.s32 0, %v839
    %v841 = vadd.s32 %v836, 1
    %vm842 = vcmp.gt.s32.totalorder %v841, 0
    %v843 = vsel %vm842, %v841, 0
    %v844 = vshrl.u32 %v843, 5
    %v845 = vand.u32 %v843, 31
    %v846 = vsub.s32 32, %v845
    %v847 = vshrl.u32 683565275, %v846
    %v848 = vshll.u32 683565275, %v845
    %v849 = vshrl.u32 2475754826, %v846
    %v850 = vor.u32 %v848, %v849
    %v851 = vshll.u32 2475754826, %v845
    %v852 = vshrl.u32 2131351028, %v846
    %v853 = vor.u32 %v851, %v852
    %v854 = vshll.u32 2131351028, %v845
    %v855 = vshrl.u32 2102212464, %v846
    %v856 = vor.u32 %v854, %v855
    %v857 = vshll.u32 2102212464, %v845
    %v858 = vshrl.u32 920167782, %v846
    %v859 = vor.u32 %v857, %v858
    %v860 = vshll.u32 920167782, %v845
    %v861 = vshrl.u32 1326507024, %v846
    %v862 = vor.u32 %v860, %v861
    %vm863 = vcmp.lt.s32.totalorder %v844, 1
    %vm864 = vcmp.lt.s32.totalorder %v844, 2
    %vm865 = vcmp.lt.s32.totalorder %v844, 3
    %vm866 = vcmp.lt.s32.totalorder %v844, 4
    %v867 = vsel %vm863, %v847, %v850
    %v868 = vsel %vm866, %v856, 2102212464
    %v869 = vsel %vm865, %v853, %v868
    %v870 = vsel %vm864, %v867, %v869
    %v871 = vsel %vm863, %v850, %v853
    %v872 = vsel %vm866, %v859, 920167782
    %v873 = vsel %vm865, %v856, %v872
    %v874 = vsel %vm864, %v871, %v873
    %v875 = vsel %vm863, %v853, %v856
    %v876 = vsel %vm866, %v862, 1326507024
    %v877 = vsel %vm865, %v859, %v876
    %v878 = vsel %vm864, %v875, %v877
    %v879 = vshll.u32 %v839, 8
    %v880 = vmul.u32.u64.compose %v879, %v878
    %v881 = vextract.low.u32 %v880
    %v882 = vextract.high.u32 %v880
    %v883 = vmul.u32.u64.compose %v879, %v874
    %v884 = vextract.low.u32 %v883
    %v885 = vextract.high.u32 %v883
    %v886 = vmul.u32 %v879, %v870
    %v887 = vadd.s32 %v882, %v884
    %vm888 = vc.u32 %v882, %v884
    %v889 = vadd.s32 %v885, 1
    %v890 = vsel %vm888, %v889, %v885
    %v891 = vadd.s32 %v886, %v890
    %v892 = vadd.s32 %v891, 536870912
    %v893 = vshrl.u32 %v892, 30
    %v894 = vshll.u32 %v893, 30
    %v895 = vsub.s32 %v891, %v894
    %vm896 = vcmp.lt.s32.totalorder %v895, 0
    %v897 = vsub.s32 0, %v895
    %v898 = vsel %vm896, %v897, %v895
    %v899 = vclz %v898
    %v900 = vsub.s32 %v899, 2
    %vm901 = vcmp.gt.s32.totalorder 0, %v900
    %v902 = vsel %vm901, 0, %v900
    %v903 = vsub.s32 32, %v902
    %v904 = vshll.u32 %v895, %v902
    %v905 = vshrl.u32 %v887, %v903
    %v906 = vor.u32 %v904, %v905
    %v907 = vsub.s32 4294967266, %v902
    %v908 = vadd.s32 %v907, 127
    %v909 = vshll.u32 %v908, 23
    %v910 = vor.u32 4788187, %v909
    %v911 = vand.u32 2147483647, %v910
    %v913 = vcvt.s32.f32 %v906
    %v914 = vmul.f32 %v913, %v911
    %v915 = vxor.u32 %v914, 2147483648
    %v916 = vsel %vm833, %v915, %v914
    %v917 = vsub.s32 4, %v893
    %v918 = vsel %vm833, %v917, %v893
    %v919 = vsel %vm832, %v166, %v916
    %v920 = vsel %vm832, 0, %v918
    %v921 = vcosq.f32.pop %v919
    %v922 = vsinq.f32.pop %v919
    %vm923 = vweird.f32 %v166
    %v924 = vand.u32 %v920, 3
    %vm925 = vcmp.lt.s32.totalorder %v924, 2
    %vm926 = vcmp.eq.s32.totalorder %v924, 0
    %v927 = vxor.u32 %v922, 2147483648
    %v928 = vsel %vm926, %v921, %v927
    %vm929 = vcmp.eq.s32.totalorder %v924, 2
    %v930 = vxor.u32 %v921, 2147483648
    %v931 = vsel %vm929, %v930, %v922
    %v932 = vsel %vm925, %v928, %v931
    %v933 = vsel %vm923, nan, %v932
    %v934 = vand.u32 2147483647, %v167
    %vm935 = vcmp.le.f32.partialorder %v934, 0.7853982
    %vm936 = vcmp.lt.s32.totalorder %v167, 0
    %v937 = vand.u32 %v167, 2139095040
    %v938 = vshrl.u32 %v937, 23
    %v939 = vsub.s32 %v938, 127
    %v940 = vand.u32 2147483647, %v167
    %v941 = vand.u32 %v940, 8388607
    %v942 = vor.u32 %v941, 8388608
    %v943 = vsub.s32 0, %v942
    %v944 = vadd.s32 %v939, 1
    %vm945 = vcmp.gt.s32.totalorder %v944, 0
    %v946 = vsel %vm945, %v944, 0
    %v947 = vshrl.u32 %v946, 5
    %v948 = vand.u32 %v946, 31
    %v949 = vsub.s32 32, %v948
    %v950 = vshrl.u32 683565275, %v949
    %v951 = vshll.u32 683565275, %v948
    %v952 = vshrl.u32 2475754826, %v949
    %v953 = vor.u32 %v951, %v952
    %v954 = vshll.u32 2475754826, %v948
    %v955 = vshrl.u32 2131351028, %v949
    %v956 = vor.u32 %v954, %v955
    %v957 = vshll.u32 2131351028, %v948
    %v958 = vshrl.u32 2102212464, %v949
    %v959 = vor.u32 %v957, %v958
    %v960 = vshll.u32 2102212464, %v948
    %v961 = vshrl.u32 920167782, %v949
    %v962 = vor.u32 %v960, %v961
    %v963 = vshll.u32 920167782, %v948
    %v964 = vshrl.u32 1326507024, %v949
    %v965 = vor.u32 %v963, %v964
    %vm966 = vcmp.lt.s32.totalorder %v947, 1
    %vm967 = vcmp.lt.s32.totalorder %v947, 2
    %vm968 = vcmp.lt.s32.totalorder %v947, 3
    %vm969 = vcmp.lt.s32.totalorder %v947, 4
    %v970 = vsel %vm966, %v950, %v953
    %v971 = vsel %vm969, %v959, 2102212464
    %v972 = vsel %vm968, %v956, %v971
    %v973 = vsel %vm967, %v970, %v972
    %v974 = vsel %vm966, %v953, %v956
    %v975 = vsel %vm969, %v962, 920167782
    %v976 = vsel %vm968, %v959, %v975
    %v977 = vsel %vm967, %v974, %v976
    %v978 = vsel %vm966, %v956, %v959
    %v979 = vsel %vm969, %v965, 1326507024
    %v980 = vsel %vm968, %v962, %v979
    %v981 = vsel %vm967, %v978, %v980
    %v982 = vshll.u32 %v942, 8
    %v983 = vmul.u32.u64.compose %v982, %v981
    %v984 = vextract.low.u32 %v983
    %v985 = vextract.high.u32 %v983
    %v986 = vmul.u32.u64.compose %v982, %v977
    %v987 = vextract.low.u32 %v986
    %v988 = vextract.high.u32 %v986
    %v989 = vmul.u32 %v982, %v973
    %v990 = vadd.s32 %v985, %v987
    %vm991 = vc.u32 %v985, %v987
    %v992 = vadd.s32 %v988, 1
    %v993 = vsel %vm991, %v992, %v988
    %v994 = vadd.s32 %v989, %v993
    %v995 = vadd.s32 %v994, 536870912
    %v996 = vshrl.u32 %v995, 30
    %v997 = vshll.u32 %v996, 30
    %v998 = vsub.s32 %v994, %v997
    %vm999 = vcmp.lt.s32.totalorder %v998, 0
    %v1000 = vsub.s32 0, %v998
    %v1001 = vsel %vm999, %v1000, %v998
    %v1002 = vclz %v1001
    %v1003 = vsub.s32 %v1002, 2
    %vm1004 = vcmp.gt.s32.totalorder 0, %v1003
    %v1005 = vsel %vm1004, 0, %v1003
    %v1006 = vsub.s32 32, %v1005
    %v1007 = vshll.u32 %v998, %v1005
    %v1008 = vshrl.u32 %v990, %v1006
    %v1009 = vor.u32 %v1007, %v1008
    %v1010 = vsub.s32 4294967266, %v1005
    %v1011 = vadd.s32 %v1010, 127
    %v1012 = vshll.u32 %v1011, 23
    %v1013 = vor.u32 4788187, %v1012
    %v1014 = vand.u32 2147483647, %v1013
    %v1016 = vcvt.s32.f32 %v1009
    %v1017 = vmul.f32 %v1016, %v1014
    %v1018 = vxor.u32 %v1017, 2147483648
    %v1019 = vsel %vm936, %v1018, %v1017
    %v1020 = vsub.s32 4, %v996
    %v1021 = vsel %vm936, %v1020, %v996
    %v1022 = vsel %vm935, %v167, %v1019
    %v1023 = vsel %vm935, 0, %v1021
    %v1024 = vcosq.f32.pop %v1022
    %v1025 = vsinq.f32.pop %v1022
    %vm1026 = vweird.f32 %v167
    %v1027 = vand.u32 %v1023, 3
    %vm1028 = vcmp.lt.s32.totalorder %v1027, 2
    %vm1029 = vcmp.eq.s32.totalorder %v1027, 0
    %v1030 = vxor.u32 %v1025, 2147483648
    %v1031 = vsel %vm1029, %v1024, %v1030
    %vm1032 = vcmp.eq.s32.totalorder %v1027, 2
    %v1033 = vxor.u32 %v1024, 2147483648
    %v1034 = vsel %vm1032, %v1033, %v1025
    %v1035 = vsel %vm1028, %v1031, %v1034
    %v1036 = vsel %vm1026, nan, %v1035
    %v1037 = vmul.f32 %v727, %v610
    %v1038 = vmul.f32 %v830, %v610
    %v1039 = vmul.f32 %v933, %v614
    %v1040 = vmul.f32 %v1036, %v614
    %1041 = vst.msk [vmem:[%s1 + $0x10] sm:$0xff] %vm55, %v1037
    %1042 = vst.msk [vmem:[%s1 + $0x18] sm:$0xff] %vm55, %v1038
    %1043 = vst.msk [vmem:[%s1 + $0x30] sm:$0xff] %vm55, %v1039
    %1044 = vst.msk [vmem:[%s1 + $0x38] sm:$0xff] %vm55, %v1040
    // Predicated region
    $region14: #{tpu_custom_call.1} parent=1 // pred_check
      _
    $region15: #{tpu_custom_call.1} parent=1 // pred_check_branch
      %1046 = sbr.rel (0) target = $region17
    $region16: #{tpu_custom_call.1} parent=1 // pred_region
      _
    $region17: #{tpu_custom_call.1} parent=1 // pred_fallthru
      _
    // Predicated region
    $region18: #{tpu_custom_call.1} parent=1 // pred_check
      _
    $region19: #{tpu_custom_call.1} parent=1 // pred_check_branch
      %1048 = sbr.rel (0) target = $region21
    $region20: #{tpu_custom_call.1} parent=1 // pred_region
      _
    $region21: #{tpu_custom_call.1} parent=1 // pred_fallthru
      _
    %1049 = vsyncpa [#allocation6], 1

</llo_original>
